<compile_context>
chip_gen: v7x
topology: tpu7x:2x2x1
jax: 0.10.0
libtpu: 0.0.40
codegen_flags: <defaults>
</compile_context>

<pallas_src>
import functools

import jax
import jax.numpy as jnp
from jax.experimental import pallas as pl
from jax.experimental.pallas import tpu as pltpu

LANE = 128
BF16_PACK = 16  # bf16 sublane packing


def _round_up(n, m):
    return (n + m - 1) // m * m


def mlp_kernel(x_ref, w1_ref, b1_ref, w2_ref, b2_ref, w3_ref, b3_ref, o_ref):
    # fc1: (H, D) bf16 @ (D, TB) bf16 -> (H, TB), f32 accumulation on the MXU.
    h1 = jnp.dot(w1_ref[...], x_ref[...], preferred_element_type=jnp.float32)
    h1 = jnp.maximum(h1 + b1_ref[...], 0.0)          # bias broadcasts over lanes
    # fc2: resident (H, H) f32 weight against f32 activations (no bf16 rounding
    # of h1 -> matches the f32 reference semantics of the PyTorch module).
    h2 = jnp.dot(w2_ref[...], h1, preferred_element_type=jnp.float32)
    h2 = jnp.maximum(h2 + b2_ref[...], 0.0)
    # fc3 (output_size == 1): VPU multiply + sublane reduction -> lane-dense row.
    # TODO(synk): generalize to output_size > 1 (small MXU matmul + padded out).
    logits = jnp.sum(h2 * w3_ref[...], axis=0, keepdims=True) + b3_ref[0, 0]
    o_ref[...] = jax.nn.sigmoid(logits).astype(o_ref.dtype)


@functools.partial(jax.jit, static_argnames=("batch_tile",))
def mlp_forward(x, params, *, batch_tile=2048):
    """x: (B, input_size) float32 -> (B, 1) float32."""
    B, d_in = x.shape
    h_pad, d_w = params["w1"].shape
    assert d_w == d_in, "params were initialized for a different input_size"

    # Batch tiling: lane-multiple tiles, and >= 2 tiles when the batch allows
    # it so the "parallel" grid axis can shard across v7x's 2 TensorCores.
    b_pad = _round_up(B, LANE)
    tb = min(batch_tile, b_pad)
    if b_pad >= 2 * LANE and b_pad // tb < 2:
        tb = _round_up((b_pad + 1) // 2, LANE)
    b_pad = _round_up(b_pad, tb)

    # cast + pad + transpose fuse into one small HBM pass under this jit.
    # Resulting (d_in, b_pad) bf16 slab is dense in HBM: 16 sublanes (= bf16
    # pack) x lane-dense batch axis.
    x_t = jnp.pad(x.astype(jnp.bfloat16), ((0, b_pad - B), (0, 0))).T

    out = pl.pallas_call(
        mlp_kernel,
        out_shape=jax.ShapeDtypeStruct((1, b_pad), jnp.float32),
        grid=(b_pad // tb,),
        in_specs=[
            pl.BlockSpec((d_in, tb), lambda i: (0, i)),         # x tile (streamed)
            pl.BlockSpec((h_pad, d_in), lambda i: (0, 0)),      # w1 (resident)
            pl.BlockSpec((h_pad, 1), lambda i: (0, 0)),         # b1
            pl.BlockSpec((h_pad, h_pad), lambda i: (0, 0)),     # w2 (resident, f32)
            pl.BlockSpec((h_pad, 1), lambda i: (0, 0)),         # b2
            pl.BlockSpec((h_pad, 1), lambda i: (0, 0)),         # w3 column
            pl.BlockSpec(memory_space=pltpu.MemorySpace.SMEM),  # b3 scalar
        ],
        out_specs=pl.BlockSpec((1, tb), lambda i: (0, i)),
        compiler_params=pltpu.CompilerParams(
            dimension_semantics=("parallel",),
            vmem_limit_bytes=32 * 1024 * 1024,
        ),
    )(x_t, params["w1"], params["b1"], params["w2"], params["b2"],
      params["w3"], params["b3"])

    return out[0, :B].reshape(B, 1)


def init_params(key, input_size, hidden_size=32, output_size=1):
    """PyTorch nn.Linear-style init.

    w1: (h_pad, input_size) bf16 (matmul operand against bf16 x)
    w2: (h_pad, h_pad) f32 (resident; keeps h1 f32 through fc2)
    b1/b2: (h_pad, 1) f32; w3: (h_pad, 1) f32 column; b3: (1, 1) f32 (SMEM).
    h_pad only rounds hidden_size up to the bf16 sublane pack (32 -> 32);
    padded rows/cols are zero so the padding is numerically inert.
    """
    assert output_size == 1, "fused kernel assumes the module default output_size=1"
    h_pad = _round_up(hidden_size, BF16_PACK)
    ks = jax.random.split(key, 6)

    def linear(kw, kb, fan_in, fan_out, in_pad, out_pad):
        bound = 1.0 / (fan_in ** 0.5)   # nn.Linear default: U(-1/sqrt(in), 1/sqrt(in))
        w = jax.random.uniform(kw, (fan_out, fan_in), jnp.float32, -bound, bound)
        b = jax.random.uniform(kb, (fan_out,), jnp.float32, -bound, bound)
        w_pad = jnp.zeros((out_pad, in_pad), jnp.float32).at[:fan_out, :fan_in].set(w)
        b_pad = jnp.zeros((out_pad, 1), jnp.float32).at[:fan_out, 0].set(b)
        return w_pad, b_pad

    w1, b1 = linear(ks[0], ks[1], input_size, hidden_size, input_size, h_pad)
    w2, b2 = linear(ks[2], ks[3], hidden_size, hidden_size, h_pad, h_pad)
    w3, b3 = linear(ks[4], ks[5], hidden_size, output_size, h_pad, 1)

    return {
        "w1": w1.astype(jnp.bfloat16), "b1": b1,
        "w2": w2, "b2": b2,            # f32 (resident, tiny)
        "w3": w3.T,                    # (h_pad, 1) f32 column for the VPU reduction
        "b3": b3,                      # (1, 1) f32 scalar
    }


if __name__ == "__main__":
    key = jax.random.PRNGKey(0)
    k_x, k_p = jax.random.split(key)

    batch, input_size, hidden_size, output_size = 8, 16, 32, 1
    x = jax.random.normal(k_x, (batch, input_size), dtype=jnp.float32)
    params = init_params(k_p, input_size, hidden_size, output_size)

    out = jax.block_until_ready(mlp_forward(x, params))
    assert out.shape == (batch, output_size)

    # Pure-JAX f32 reference (x and w1 rounded to bf16 exactly as the kernel does;
    # everything downstream stays f32, matching the kernel).
    xb = x.astype(jnp.bfloat16).astype(jnp.float32)
    w1f = params["w1"].astype(jnp.float32)
    h1 = jnp.maximum(xb @ w1f.T + params["b1"][:, 0], 0.0)
    h2 = jnp.maximum(h1 @ params["w2"].T + params["b2"][:, 0], 0.0)
    ref = jax.nn.sigmoid(h2 @ params["w3"] + params["b3"][0, 0])

    assert jnp.allclose(out, ref, atol=2e-3, rtol=2e-3), \
        float(jnp.max(jnp.abs(out - ref)))
    print("KERNEL_OK")
</pallas_src>

<mosaic_0001>
module attributes {stable_mosaic.version = 11 : i64} {
  func.func @mlp_kernel(%arg0: i32, %arg1: memref<16x128xbf16, #tpu.memory_space<vmem>>, %arg2: memref<32x16xbf16, #tpu.memory_space<vmem>>, %arg3: memref<32x1xf32, #tpu.memory_space<vmem>>, %arg4: memref<32x32xf32, #tpu.memory_space<vmem>>, %arg5: memref<32x1xf32, #tpu.memory_space<vmem>>, %arg6: memref<32x1xf32, #tpu.memory_space<vmem>>, %arg7: memref<1x1xf32, #tpu.memory_space<smem>>, %arg8: memref<1x128xf32, #tpu.memory_space<vmem>>) attributes {dimension_semantics = [#tpu.dimension_semantics<parallel>], iteration_bounds = array<i64: 1>, scalar_prefetch = 0 : i64, scratch_operands = 0 : i64, tpu.core_type = #tpu.core_type<tc>, window_params = [{transform_indices = @transform_0, window_bounds = array<i64: 16, 128>}, {pipeline_mode = #tpu.pipeline_mode<synchronous>, transform_indices = @transform_1, window_bounds = array<i64: 32, 16>}, {pipeline_mode = #tpu.pipeline_mode<synchronous>, transform_indices = @transform_2, window_bounds = array<i64: 32, 1>}, {pipeline_mode = #tpu.pipeline_mode<synchronous>, transform_indices = @transform_3, window_bounds = array<i64: 32, 32>}, {pipeline_mode = #tpu.pipeline_mode<synchronous>, transform_indices = @transform_4, window_bounds = array<i64: 32, 1>}, {pipeline_mode = #tpu.pipeline_mode<synchronous>, transform_indices = @transform_5, window_bounds = array<i64: 32, 1>}, {transform_indices = @transform_6, window_bounds = array<i64: 1, 1>}, {transform_indices = @transform_7, window_bounds = array<i64: 1, 128>}]} {
    %c0 = arith.constant 0 : index
    %c0_0 = arith.constant 0 : index
    %0 = vector.load %arg2[%c0, %c0_0] : memref<32x16xbf16, #tpu.memory_space<vmem>>, vector<32x16xbf16>
    %c0_1 = arith.constant 0 : index
    %c0_2 = arith.constant 0 : index
    %1 = vector.load %arg1[%c0_1, %c0_2] : memref<16x128xbf16, #tpu.memory_space<vmem>>, vector<16x128xbf16>
    %cst = arith.constant dense<0.000000e+00> : vector<32x128xf32>
    %2 = tpu.matmul %0, %1, %cst {dimension_numbers = #tpu.dot_dimension_numbers<[1], [0], [0], [1], [0, 0, 1, 1], [], []>} : vector<32x16xbf16>, vector<16x128xbf16>, vector<32x128xf32> -> vector<32x128xf32>
    %c0_3 = arith.constant 0 : index
    %c0_4 = arith.constant 0 : index
    %3 = vector.load %arg3[%c0_3, %c0_4] : memref<32x1xf32, #tpu.memory_space<vmem>>, vector<32x1xf32>
    %4 = vector.broadcast %3 : vector<32x1xf32> to vector<32x128xf32>
    %5 = arith.addf %2, %4 : vector<32x128xf32>
    %cst_5 = arith.constant 0.000000e+00 : f32
    %6 = vector.broadcast %cst_5 : f32 to vector<32x128xf32>
    %7 = arith.maximumf %5, %6 : vector<32x128xf32>
    %c0_6 = arith.constant 0 : index
    %c0_7 = arith.constant 0 : index
    %8 = vector.load %arg4[%c0_6, %c0_7] : memref<32x32xf32, #tpu.memory_space<vmem>>, vector<32x32xf32>
    %cst_8 = arith.constant dense<0.000000e+00> : vector<32x128xf32>
    %9 = tpu.matmul %8, %7, %cst_8 {dimension_numbers = #tpu.dot_dimension_numbers<[1], [0], [0], [1], [0, 0, 1, 1], [], []>} : vector<32x32xf32>, vector<32x128xf32>, vector<32x128xf32> -> vector<32x128xf32>
    %c0_9 = arith.constant 0 : index
    %c0_10 = arith.constant 0 : index
    %10 = vector.load %arg5[%c0_9, %c0_10] : memref<32x1xf32, #tpu.memory_space<vmem>>, vector<32x1xf32>
    %11 = vector.broadcast %10 : vector<32x1xf32> to vector<32x128xf32>
    %12 = arith.addf %9, %11 : vector<32x128xf32>
    %cst_11 = arith.constant 0.000000e+00 : f32
    %13 = vector.broadcast %cst_11 : f32 to vector<32x128xf32>
    %14 = arith.maximumf %12, %13 : vector<32x128xf32>
    %c0_12 = arith.constant 0 : index
    %c0_13 = arith.constant 0 : index
    %15 = vector.load %arg6[%c0_12, %c0_13] : memref<32x1xf32, #tpu.memory_space<vmem>>, vector<32x1xf32>
    %16 = vector.broadcast %15 : vector<32x1xf32> to vector<32x128xf32>
    %17 = arith.mulf %14, %16 : vector<32x128xf32>
    %cst_14 = arith.constant dense<0.000000e+00> : vector<128xf32>
    %18 = vector.multi_reduction <add>, %17, %cst_14 [0] : vector<32x128xf32> to vector<128xf32>
    %19 = vector.shape_cast %18 : vector<128xf32> to vector<1x128xf32>
    %c0_15 = arith.constant 0 : index
    %c0_16 = arith.constant 0 : index
    %20 = memref.load %arg7[%c0_15, %c0_16] : memref<1x1xf32, #tpu.memory_space<smem>>
    %21 = vector.broadcast %20 : f32 to vector<1x128xf32>
    %22 = arith.addf %19, %21 : vector<1x128xf32>
    %23 = arith.negf %22 : vector<1x128xf32>
    %24 = math.exp %23 : vector<1x128xf32>
    %cst_17 = arith.constant 1.000000e+00 : f32
    %25 = vector.broadcast %cst_17 : f32 to vector<1x128xf32>
    %26 = arith.addf %25, %24 : vector<1x128xf32>
    %27 = arith.divf %25, %26 : vector<1x128xf32>
    %c0_18 = arith.constant 0 : index
    %c0_19 = arith.constant 0 : index
    %28 = vector.load %arg8[%c0_18, %c0_19] : memref<1x128xf32, #tpu.memory_space<vmem>>, vector<1x128xf32>
    tpu.vector_store %arg8[%c0_18, %c0_19], %27 {strides = array<i32>} : memref<1x128xf32, #tpu.memory_space<vmem>>, vector<1x128xf32>,
    return
  }
  func.func @transform_0(%arg0: i32) -> (i32, i32) {
    %c0_i32 = arith.constant 0 : i32
    %c0_i32_0 = arith.constant 0 : i32
    return %c0_i32, %arg0 : i32, i32
  }
  func.func @transform_1(%arg0: i32) -> (i32, i32) {
    %c0_i32 = arith.constant 0 : i32
    %c0_i32_0 = arith.constant 0 : i32
    %c0_i32_1 = arith.constant 0 : i32
    return %c0_i32, %c0_i32_0 : i32, i32
  }
  func.func @transform_2(%arg0: i32) -> (i32, i32) {
    %c0_i32 = arith.constant 0 : i32
    %c0_i32_0 = arith.constant 0 : i32
    %c0_i32_1 = arith.constant 0 : i32
    return %c0_i32, %c0_i32_0 : i32, i32
  }
  func.func @transform_3(%arg0: i32) -> (i32, i32) {
    %c0_i32 = arith.constant 0 : i32
    %c0_i32_0 = arith.constant 0 : i32
    %c0_i32_1 = arith.constant 0 : i32
    return %c0_i32, %c0_i32_0 : i32, i32
  }
  func.func @transform_4(%arg0: i32) -> (i32, i32) {
    %c0_i32 = arith.constant 0 : i32
    %c0_i32_0 = arith.constant 0 : i32
    %c0_i32_1 = arith.constant 0 : i32
    return %c0_i32, %c0_i32_0 : i32, i32
  }
  func.func @transform_5(%arg0: i32) -> (i32, i32) {
    %c0_i32 = arith.constant 0 : i32
    %c0_i32_0 = arith.constant 0 : i32
    %c0_i32_1 = arith.constant 0 : i32
    return %c0_i32, %c0_i32_0 : i32, i32
  }
  func.func @transform_6(%arg0: i32) -> (i32, i32) {
    %c0_i32 = arith.constant 0 : i32
    %c0_i32_0 = arith.constant 0 : i32
    %c0_i32_1 = arith.constant 0 : i32
    return %c0_i32, %c0_i32_0 : i32, i32
  }
  func.func @transform_7(%arg0: i32) -> (i32, i32) {
    %c0_i32 = arith.constant 0 : i32
    %c0_i32_0 = arith.constant 0 : i32
    return %c0_i32, %arg0 : i32, i32
  }
}

</mosaic_0001>

<llo_original>
// kernel: mlp_forward.1
$region0: #{mlp_forward.1}
  #allocation0 [shape = 'u32[]', space=smem, size = 0x4, offset = 0x4, fixed_abs, tag = 'smem constant byte address 0x4 - core index']
  #allocation1 [shape = 'u32[144,128]{1,0:T(1,128)}', space=vmem, size = 0x12000, scoped, tag = 'internal scratch']
  #allocation2 [shape = 'f32[1,1]{1,0:T(1,128)S(6)}', space=smem, size = 0x200, scoped, tag = 'scoped memory for mlp_forward.1']
  %s0 = inlined_call_operand.vmem [shape: bf16[16,128], index: 0, kind: input, shape index: {}]
  %s1 = inlined_call_operand.vmem [shape: bf16[32,16], index: 1, kind: input, shape index: {}]
  %s2 = inlined_call_operand.vmem [shape: f32[32,1], index: 2, kind: input, shape index: {}]
  %s3 = inlined_call_operand.vmem [shape: f32[32,32], index: 3, kind: input, shape index: {}]
  %s4 = inlined_call_operand.vmem [shape: f32[32,1], index: 4, kind: input, shape index: {}]
  %s5 = inlined_call_operand.vmem [shape: f32[32,1], index: 5, kind: input, shape index: {}]
  %s6 = inlined_call_operand.<no memory space> [shape: f32[1,1], index: 6, kind: input, shape index: {}]
  %s7 = inlined_call_operand.vmem [shape: f32[1,128], index: 7, kind: output, shape index: {}]
  %s8 = sld [smem:[#allocation0]]
  $region38: #{mlp_forward.1} parent=0
    _
  %s10 = ssub.s32 1, %s8
  %s11 = scalar_select 0, %s10, %s8
  %12 = sst [smem:[#allocation2]] %s6
  // Predicated region
  $region2: #{mlp_forward.1} parent=0 // pred_check
    _
  $region3: #{mlp_forward.1} parent=0 // pred_check_branch
    %14 = sbr.rel (0) target = $region5
  $region4: #{mlp_forward.1} parent=0 // pred_region
    _
  $region5: #{mlp_forward.1} parent=0 // pred_fallthru
    _
  // Predicated region
  $region6: #{mlp_forward.1} parent=0 // pred_check
    _
  $region7: #{mlp_forward.1} parent=0 // pred_check_branch
    %16 = sbr.rel (0) target = $region9
  $region8: #{mlp_forward.1} parent=0 // pred_region
    _
  $region9: #{mlp_forward.1} parent=0 // pred_fallthru
    _
  // Predicated region
  $region10: #{mlp_forward.1} parent=0 // pred_check
    _
  $region11: #{mlp_forward.1} parent=0 // pred_check_branch
    %18 = sbr.rel (0) target = $region13
  $region12: #{mlp_forward.1} parent=0 // pred_region
    _
  $region13: #{mlp_forward.1} parent=0 // pred_fallthru
    _
  // Predicated region
  $region14: #{mlp_forward.1} parent=0 // pred_check
    _
  $region15: #{mlp_forward.1} parent=0 // pred_check_branch
    %20 = sbr.rel (0) target = $region17
  $region16: #{mlp_forward.1} parent=0 // pred_region
    _
  $region17: #{mlp_forward.1} parent=0 // pred_fallthru
    _
  // Predicated region
  $region18: #{mlp_forward.1} parent=0 // pred_check
    _
  $region19: #{mlp_forward.1} parent=0 // pred_check_branch
    %22 = sbr.rel (0) target = $region21
  $region20: #{mlp_forward.1} parent=0 // pred_region
    _
  $region21: #{mlp_forward.1} parent=0 // pred_fallthru
    _
  // Predicated region
  $region22: #{mlp_forward.1} parent=0 // pred_check
    _
  $region23: #{mlp_forward.1} parent=0 // pred_check_branch
    %24 = sbr.rel (0) target = $region25
  $region24: #{mlp_forward.1} parent=0 // pred_region
    _
  $region25: #{mlp_forward.1} parent=0 // pred_fallthru
    _
  // Predicated region
  $region26: #{mlp_forward.1} parent=0 // pred_check
    _
  $region27: #{mlp_forward.1} parent=0 // pred_check_branch
    %26 = sbr.rel (0) target = $region29
  $region28: #{mlp_forward.1} parent=0 // pred_region
    _
  $region29: #{mlp_forward.1} parent=0 // pred_fallthru
    _
  %v28 = vld [vmem:[%s1] sm:$0xf]
  %v29 = vld [vmem:[%s1 + $0x4] sm:$0xf]
  %v30 = vld [vmem:[%s1 + $0x8] sm:$0xf]
  %v31 = vld [vmem:[%s1 + $0xc] sm:$0xf]
  %v32 = vld [vmem:[%s0] sm:$0xf]
  %v33 = vld [vmem:[%s0 + $0x4] sm:$0xf]
  %v34 = vld [vmem:[%s2] sm:$0xff]
  %v35 = vld [vmem:[%s2 + $0x8] sm:$0xff]
  %v36 = vld [vmem:[%s2 + $0x10] sm:$0xff]
  %v37 = vld [vmem:[%s2 + $0x18] sm:$0xff]
  %39 = vset.pattern.permute.xlu0 0
  %40 = vperm.xlu0 %39, %v34
  %v41 = vpop.permute.xlu0 %40
  %44 = vset.pattern.permute.xlu0 0
  %45 = vperm.xlu0 %44, %v35
  %v46 = vpop.permute.xlu0 %45
  %49 = vset.pattern.permute.xlu0 0
  %50 = vperm.xlu0 %49, %v36
  %v51 = vpop.permute.xlu0 %50
  %54 = vset.pattern.permute.xlu0 0
  %55 = vperm.xlu0 %54, %v37
  %v56 = vpop.permute.xlu0 %55
  %v62 = vunpack.c.l.b16 %v28
  %v63 = vunpack.c.l.b16 %v29
  %v64 = vunpack.c.l.b16 %v30
  %v65 = vunpack.c.l.b16 %v31
  %v66 = vpack.c.b16 %v63, %v62
  %v67 = vpack.c.b16 %v65, %v64
  %v70 = vunpack.c.l.b16 %v32
  %v71 = vunpack.c.l.b16 %v33
  %v72 = vpack.c.b16 %v71, %v70
  %vm74 = vcmask 130048
  %v76 = vsel %vm74, %v66, 0
  %v79 = vsel %vm74, %v67, 0
  %81 = vmatprep.subr.bf16.mxu0 0
  %82 = vmatpush1.bf16.msra.mxu0 %v72
  %83 = vmatprep.subr.bf16.mxu0 0
  %84 = vmatpush1.bf16.msra.mxu0 0
  %85 = vmatprep.subr.bf16.mxu0 0
  %86 = vmatpush1.bf16.msra.mxu0 0
  %87 = vmatprep.subr.bf16.mxu0 0
  %88 = vmatpush1.bf16.msra.mxu0 0
  %89 = vmatprep.subr.bf16.mxu0 0
  %90 = vmatpush1.bf16.msra.mxu0 0
  %91 = vmatprep.subr.bf16.mxu0 0
  %92 = vmatpush1.bf16.msra.mxu0 0
  %93 = vmatprep.subr.bf16.mxu0 0
  %94 = vmatpush1.bf16.msra.mxu0 0
  %95 = vmatprep.subr.bf16.mxu0 0
  %96 = vmatpush1.bf16.msra.mxu0 0
  %97 = vmatprep.subr.bf16.mxu0 0
  %98 = vmatpush1.bf16.msra.mxu0 0
  %99 = vmatprep.subr.bf16.mxu0 0
  %100 = vmatpush1.bf16.msra.mxu0 0
  %101 = vmatprep.subr.bf16.mxu0 0
  %102 = vmatpush1.bf16.msra.mxu0 0
  %103 = vmatprep.subr.bf16.mxu0 0
  %104 = vmatpush1.bf16.msra.mxu0 0
  %105 = vmatprep.subr.bf16.mxu0 0
  %106 = vmatpush1.bf16.msra.mxu0 0
  %107 = vmatprep.subr.bf16.mxu0 0
  %108 = vmatpush1.bf16.msra.mxu0 0
  %109 = vmatprep.subr.bf16.mxu0 0
  %110 = vmatpush1.bf16.msra.mxu0 0
  %111 = vmatprep.subr.bf16.mxu0 0
  %112 = vmatpush1.bf16.msra.mxu0 0
  %113 = vmatprep.mubr.bf16.mxu0 0
  %114 = vmatmul.mubr.bf16.gmra.mrb[0].mxu0 %v76
  %v115 = vpop.f32.mrb[0].mxu0
  %v116 = vadd.f32 %v41, %v115
  %v117 = vpop.f32.mrb[0].mxu0
  %v118 = vpop.f32.mrb[0].mxu0
  %v119 = vadd.f32 %v46, %v118
  %v120 = vpop.f32.mrb[0].mxu0
  %121 = vmatprep.mubr.bf16.mxu0 0
  %122 = vmatmul.mubr.bf16.gmra.mrb[0].mxu0 %v79
  %v123 = vpop.f32.mrb[0].mxu0
  %v124 = vadd.f32 %v51, %v123
  %v125 = vpop.f32.mrb[0].mxu0
  %v126 = vpop.f32.mrb[0].mxu0
  %v127 = vadd.f32 %v56, %v126
  %v128 = vpop.f32.mrb[0].mxu0
  %129 = vdwg.mxu0
  %v130 = vmax.f32 %v116, 0.0
  %v131 = vmax.f32 %v119, 0.0
  %v132 = vmax.f32 %v124, 0.0
  %v133 = vmax.f32 %v127, 0.0
  %v134 = vld [vmem:[%s3] sm:$0xff]
  %v135 = vld [vmem:[%s3 + $0x8] sm:$0xff]
  %v136 = vld [vmem:[%s3 + $0x10] sm:$0xff]
  %v137 = vld [vmem:[%s3 + $0x18] sm:$0xff]
  %v138 = vld [vmem:[%s4] sm:$0xff]
  %v139 = vld [vmem:[%s4 + $0x8] sm:$0xff]
  %v140 = vld [vmem:[%s4 + $0x10] sm:$0xff]
  %v141 = vld [vmem:[%s4 + $0x18] sm:$0xff]
  %143 = vset.pattern.permute.xlu0 0
  %144 = vperm.xlu0 %143, %v138
  %v145 = vpop.permute.xlu0 %144
  %148 = vset.pattern.permute.xlu0 0
  %149 = vperm.xlu0 %148, %v139
  %v150 = vpop.permute.xlu0 %149
  %153 = vset.pattern.permute.xlu0 0
  %154 = vperm.xlu0 %153, %v140
  %v155 = vpop.permute.xlu0 %154
  %158 = vset.pattern.permute.xlu0 0
  %159 = vperm.xlu0 %158, %v141
  %v160 = vpop.permute.xlu0 %159
  %vm162 = vcmask 261120
  %v164 = vsel %vm162, %v134, 0
  %v167 = vsel %vm162, %v135, 0
  %v170 = vsel %vm162, %v136, 0
  %v173 = vsel %vm162, %v137, 0
  %175 = vmatprep.subr.mxu0 0.0
  %176 = vmatpush1.msra.mxu0 %v130
  %177 = vmatprep.subr.mxu0 0.0
  %178 = vmatpush1.msra.mxu0 %v131
  %179 = vmatprep.subr.mxu0 0.0
  %180 = vmatpush1.msra.mxu0 %v132
  %181 = vmatprep.subr.mxu0 0.0
  %182 = vmatpush1.msra.mxu0 %v133
  %183 = vmatprep.subr.mxu0 0.0
  %184 = vmatpush1.msra.mxu0 0.0
  %185 = vmatprep.subr.mxu0 0.0
  %186 = vmatpush1.msra.mxu0 0.0
  %187 = vmatprep.subr.mxu0 0.0
  %188 = vmatpush1.msra.mxu0 0.0
  %189 = vmatprep.subr.mxu0 0.0
  %190 = vmatpush1.msra.mxu0 0.0
  %191 = vmatprep.subr.mxu0 0.0
  %192 = vmatpush1.msra.mxu0 0.0
  %193 = vmatprep.subr.mxu0 0.0
  %194 = vmatpush1.msra.mxu0 0.0
  %195 = vmatprep.subr.mxu0 0.0
  %196 = vmatpush1.msra.mxu0 0.0
  %197 = vmatprep.subr.mxu0 0.0
  %198 = vmatpush1.msra.mxu0 0.0
  %199 = vmatprep.subr.mxu0 0.0
  %200 = vmatpush1.msra.mxu0 0.0
  %201 = vmatprep.subr.mxu0 0.0
  %202 = vmatpush1.msra.mxu0 0.0
  %203 = vmatprep.subr.mxu0 0.0
  %204 = vmatpush1.msra.mxu0 0.0
  %205 = vmatprep.subr.mxu0 0.0
  %206 = vmatpush1.msra.mxu0 0.0
  %207 = vmatprep.subr.mxu0 0.0
  %208 = vmatpush1.msra.mxu0 0.0
  %209 = vmatprep.subr.mxu0 0.0
  %210 = vmatpush1.msra.mxu0 0.0
  %211 = vmatprep.subr.mxu0 0.0
  %212 = vmatpush1.msra.mxu0 0.0
  %213 = vmatprep.subr.mxu0 0.0
  %214 = vmatpush1.msra.mxu0 0.0
  %215 = vmatprep.subr.mxu0 0.0
  %216 = vmatpush1.msra.mxu0 0.0
  %217 = vmatprep.subr.mxu0 0.0
  %218 = vmatpush1.msra.mxu0 0.0
  %219 = vmatprep.subr.mxu0 0.0
  %220 = vmatpush1.msra.mxu0 0.0
  %221 = vmatprep.subr.mxu0 0.0
  %222 = vmatpush1.msra.mxu0 0.0
  %223 = vmatprep.subr.mxu0 0.0
  %224 = vmatpush1.msra.mxu0 0.0
  %225 = vmatprep.subr.mxu0 0.0
  %226 = vmatpush1.msra.mxu0 0.0
  %227 = vmatprep.subr.mxu0 0.0
  %228 = vmatpush1.msra.mxu0 0.0
  %229 = vmatprep.subr.mxu0 0.0
  %230 = vmatpush1.msra.mxu0 0.0
  %231 = vmatprep.subr.mxu0 0.0
  %232 = vmatpush1.msra.mxu0 0.0
  %233 = vmatprep.subr.mxu0 0.0
  %234 = vmatpush1.msra.mxu0 0.0
  %235 = vmatprep.subr.mxu0 0.0
  %236 = vmatpush1.msra.mxu0 0.0
  %237 = vmatprep.subr.mxu0 0.0
  %238 = vmatpush1.msra.mxu0 0.0
  %239 = vmatprep.mubr.f32.mxu0 0.0
  %240 = vmatmul.mubr.f32.gmra.mrb[0].mxu0 %v164
  %v241 = vpop.f32.mrb[0].mxu0
  %v242 = vadd.f32 %v145, %v241
  %v243 = vpop.f32.mrb[0].mxu0
  %244 = vmatprep.mubr.f32.mxu0 0.0
  %245 = vmatmul.mubr.f32.gmra.mrb[0].mxu0 %v167
  %v246 = vpop.f32.mrb[0].mxu0
  %v247 = vadd.f32 %v150, %v246
  %v248 = vpop.f32.mrb[0].mxu0
  %249 = vmatprep.mubr.f32.mxu0 0.0
  %250 = vmatmul.mubr.f32.gmra.mrb[0].mxu0 %v170
  %v251 = vpop.f32.mrb[0].mxu0
  %v252 = vadd.f32 %v155, %v251
  %v253 = vpop.f32.mrb[0].mxu0
  %254 = vmatprep.mubr.f32.mxu0 0.0
  %255 = vmatmul.mubr.f32.gmra.mrb[0].mxu0 %v173
  %v256 = vpop.f32.mrb[0].mxu0
  %v257 = vadd.f32 %v160, %v256
  %v258 = vpop.f32.mrb[0].mxu0
  %259 = vdwg.mxu0
  %v260 = vmax.f32 %v242, 0.0
  %v261 = vmax.f32 %v247, 0.0
  %v262 = vmax.f32 %v252, 0.0
  %v263 = vmax.f32 %v257, 0.0
  %v264 = vld [vmem:[%s5] sm:$0xff]
  %v265 = vld [vmem:[%s5 + $0x8] sm:$0xff]
  %v266 = vld [vmem:[%s5 + $0x10] sm:$0xff]
  %v267 = vld [vmem:[%s5 + $0x18] sm:$0xff]
  %269 = vset.pattern.permute.xlu0 0
  %270 = vperm.xlu0 %269, %v264
  %v271 = vpop.permute.xlu0 %270
  %274 = vset.pattern.permute.xlu0 0
  %275 = vperm.xlu0 %274, %v265
  %v276 = vpop.permute.xlu0 %275
  %279 = vset.pattern.permute.xlu0 0
  %280 = vperm.xlu0 %279, %v266
  %v281 = vpop.permute.xlu0 %280
  %284 = vset.pattern.permute.xlu0 0
  %285 = vperm.xlu0 %284, %v267
  %v286 = vpop.permute.xlu0 %285
  %v288 = vmul.f32 %v260, %v271
  %v289 = vmul.f32 %v261, %v276
  %v290 = vmul.f32 %v262, %v281
  %v291 = vmul.f32 %v263, %v286
  %v292 = vadd.f32 %v288, %v289
  %v293 = vadd.f32 %v292, %v290
  %v294 = vadd.f32 %v293, %v291
  %v295 = vrot.slane %v294, 4
  %v296 = vadd.f32 %v294, %v295
  %v297 = vrot.slane %v296, 2
  %v298 = vadd.f32 %v296, %v297
  %v299 = vrot.slane %v298, 1
  %v300 = vadd.f32 %v298, %v299
  %s301 = sld [smem:[#allocation2]]
  %v302 = vstv %s301
  %v303 = vadd.f32 %v300, %v302
  %v304 = vxor.u32 %v303, 2147483648
  %v305 = vmul.f32 %v304, 1.442695
  %v306 = vpow.pop %v305
  %v307 = vadd.f32 %v306, 1.0
  %v308 = vrcp.pop %v307
  %v309 = vmul.f32 1.0, %v308
  %310 = vst [vmem:[%s7] sm:$0x1] %v309
  // Predicated region
  $region30: #{mlp_forward.1} parent=0 // pred_check
    _
  $region31: #{mlp_forward.1} parent=0 // pred_check_branch
    %312 = sbr.rel (0) target = $region33
  $region32: #{mlp_forward.1} parent=0 // pred_region
    _
  $region33: #{mlp_forward.1} parent=0 // pred_fallthru
    _
  // Predicated region
  $region34: #{mlp_forward.1} parent=0 // pred_check
    _
  $region35: #{mlp_forward.1} parent=0 // pred_check_branch
    %314 = sbr.rel (0) target = $region37
  $region36: #{mlp_forward.1} parent=0 // pred_region
    _
  $region37: #{mlp_forward.1} parent=0 // pred_fallthru
    _

</llo_original>
